<compile_context>
chip_gen: v6e
topology: v6e:2x2x1
jax: 0.10.0
libtpu: 0.0.40
codegen_flags: <defaults>
</compile_context>

<pallas_src>
import jax
import jax.numpy as jnp
from jax.experimental import pallas as pl
from jax.experimental.pallas import tpu as pltpu


def _round_up(x, m):
    return ((x + m - 1) // m) * m


def ffn_kernel(x_ref, w1_ref, b1_ref, w2_ref, b2_ref, g_ref, beta_ref,
               o_ref, acc_ref):
    k = pl.program_id(1)
    nk = pl.num_programs(1)

    @pl.when(k == 0)
    def _():
        acc_ref[...] = jnp.zeros_like(acc_ref)

    # ---- matmul 1 on this d_hid slab: Linear(d_in -> tk) + ReLU -------------
    x_mx = x_ref[...].astype(w1_ref.dtype)                    # bf16 operands
    h = jnp.dot(x_mx, w1_ref[...], preferred_element_type=jnp.float32)
    h = jnp.maximum(h + b1_ref[...], 0.0)                     # (tm, tk) f32

    # ---- matmul 2 partial contribution: (tm, tk) @ (tk, d_in) ---------------
    acc_ref[...] += jnp.dot(h.astype(w2_ref.dtype), w2_ref[...],
                            preferred_element_type=jnp.float32)

    # ---- finalize on the last k step ----------------------------------------
    @pl.when(k == nk - 1)
    def _():
        x_f32 = x_ref[...].astype(jnp.float32)
        # dropout (eval mode) -> identity; bias + residual add
        y = acc_ref[...] + b2_ref[...] + x_f32                # (tm, d_in) f32

        # LayerNorm over last dim, eps=1e-6 (biased variance, like PyTorch)
        mean = jnp.mean(y, axis=-1, keepdims=True)
        var = jnp.mean((y - mean) ** 2, axis=-1, keepdims=True)
        yn = (y - mean) * jax.lax.rsqrt(var + 1e-6)
        out = yn * g_ref[...] + beta_ref[...]

        # masked_fill(isnan, 0.0)
        out = jnp.where(jnp.isnan(out), jnp.zeros_like(out), out)
        o_ref[...] = out.astype(o_ref.dtype)


def positionwise_ffn(x, w1, b1, w2, b2, gamma, beta, *,
                     tm=256, tk=512, matmul_dtype=jnp.bfloat16,
                     vmem_limit_bytes=64 * 1024 * 1024):
    """x: [B, S, d_in]; w1: [d_in, d_hid]; w2: [d_hid, d_in]; 1-D biases/scales.

    Weights are stored pre-transposed to (in_features, out_features).
    """
    B, S, d_in = x.shape
    d_hid = w1.shape[1]
    M = B * S

    # Row tiling: biggest MXU-friendly tile that is not larger than the
    # (8-aligned) row count; pad rows so the grid divides evenly.
    tm = max(8, min(tm, _round_up(M, 8)))
    M_pad = _round_up(M, tm)

    # Hidden-dim (K) tiling: 128-aligned slabs; pad d_hid so tk divides it.
    # Zero-padded hidden units contribute relu(x@0 + 0) @ 0 == 0, so padding
    # does not change the result.
    tk = min(tk, _round_up(d_hid, 128))
    d_hid_pad = _round_up(d_hid, tk)

    x2 = x.reshape(M, d_in)
    if M_pad != M:
        x2 = jnp.pad(x2, ((0, M_pad - M), (0, 0)))

    w1p = w1.astype(matmul_dtype)
    w2p = w2.astype(matmul_dtype)
    b1p = b1.astype(jnp.float32)
    if d_hid_pad != d_hid:
        w1p = jnp.pad(w1p, ((0, 0), (0, d_hid_pad - d_hid)))
        w2p = jnp.pad(w2p, ((0, d_hid_pad - d_hid), (0, 0)))
        b1p = jnp.pad(b1p, ((0, d_hid_pad - d_hid),))

    b1_2 = b1p.reshape(1, d_hid_pad)
    b2_2 = b2.astype(jnp.float32).reshape(1, d_in)
    g_2 = gamma.astype(jnp.float32).reshape(1, d_in)
    be_2 = beta.astype(jnp.float32).reshape(1, d_in)

    grid = (M_pad // tm, d_hid_pad // tk)

    out = pl.pallas_call(
        ffn_kernel,
        out_shape=jax.ShapeDtypeStruct((M_pad, d_in), x.dtype),
        grid_spec=pltpu.PrefetchScalarGridSpec(
            num_scalar_prefetch=0,
            grid=grid,
            in_specs=[
                pl.BlockSpec((tm, d_in), lambda i, k: (i, 0)),   # x rows (resident over k)
                pl.BlockSpec((d_in, tk), lambda i, k: (0, k)),   # w1 k-slab
                pl.BlockSpec((1, tk), lambda i, k: (0, k)),      # b1 k-slab
                pl.BlockSpec((tk, d_in), lambda i, k: (k, 0)),   # w2 k-slab
                pl.BlockSpec((1, d_in), lambda i, k: (0, 0)),    # b2
                pl.BlockSpec((1, d_in), lambda i, k: (0, 0)),    # ln gamma
                pl.BlockSpec((1, d_in), lambda i, k: (0, 0)),    # ln beta
            ],
            out_specs=pl.BlockSpec((tm, d_in), lambda i, k: (i, 0)),
            scratch_shapes=[pltpu.VMEM((tm, d_in), jnp.float32)],
        ),
        compiler_params=pltpu.CompilerParams(
            dimension_semantics=("parallel", "arbitrary"),
            vmem_limit_bytes=vmem_limit_bytes,
        ),
    )(x2, w1p, b1_2, w2p, b2_2, g_2, be_2)

    return out[:M].reshape(B, S, d_in)


if __name__ == "__main__":
    key = jax.random.PRNGKey(0)
    # Small but lane/MXU-aligned shapes (d_in multiple of 128 for a dense
    # output store; d_hid = 4*d_in as in a typical transformer FFN).
    B, S, d_in, d_hid = 2, 8, 128, 512

    k_x, k_w1, k_b1, k_w2, k_b2 = jax.random.split(key, 5)

    x = jax.random.normal(k_x, (B, S, d_in), dtype=jnp.float32)

    # Deterministic parameter init (shapes match nn.Linear / nn.LayerNorm).
    # Linear weights stored pre-transposed to (in_features, out_features).
    w1 = jax.random.normal(k_w1, (d_in, d_hid), dtype=jnp.float32) * (1.0 / d_in) ** 0.5
    b1 = jax.random.normal(k_b1, (d_hid,), dtype=jnp.float32) * 0.01
    w2 = jax.random.normal(k_w2, (d_hid, d_in), dtype=jnp.float32) * (1.0 / d_hid) ** 0.5
    b2 = jax.random.normal(k_b2, (d_in,), dtype=jnp.float32) * 0.01
    gamma = jnp.ones((d_in,), dtype=jnp.float32)
    beta = jnp.zeros((d_in,), dtype=jnp.float32)

    # tk=256 -> two k steps, exercising the accumulator path.
    out = positionwise_ffn(x, w1, b1, w2, b2, gamma, beta, tk=256)
    jax.block_until_ready(out)

    # Reference check in plain JAX (f32 end-to-end). The kernel uses bf16
    # matmul operands with f32 accumulation, so allow a bf16-level tolerance.
    x2 = x.reshape(-1, d_in)
    h = jnp.maximum(x2 @ w1 + b1, 0.0)
    y = h @ w2 + b2 + x2
    mu = y.mean(-1, keepdims=True)
    var = ((y - mu) ** 2).mean(-1, keepdims=True)
    ref = ((y - mu) / jnp.sqrt(var + 1e-6)) * gamma + beta
    ref = jnp.where(jnp.isnan(ref), 0.0, ref).reshape(B, S, d_in)
    assert jnp.allclose(out, ref, atol=3e-2, rtol=3e-2), float(
        jnp.max(jnp.abs(out - ref)))

    print("KERNEL_OK")
</pallas_src>

<mosaic_0001>
module attributes {stable_mosaic.version = 11 : i64} {
  func.func @ffn_kernel(%arg0: i32, %arg1: i32, %arg2: memref<16x128xf32, #tpu.memory_space<vmem>>, %arg3: memref<128x256xbf16, #tpu.memory_space<vmem>>, %arg4: memref<1x256xf32, #tpu.memory_space<vmem>>, %arg5: memref<256x128xbf16, #tpu.memory_space<vmem>>, %arg6: memref<1x128xf32, #tpu.memory_space<vmem>>, %arg7: memref<1x128xf32, #tpu.memory_space<vmem>>, %arg8: memref<1x128xf32, #tpu.memory_space<vmem>>, %arg9: memref<16x128xf32, #tpu.memory_space<vmem>>, %arg10: memref<16x128xf32, #tpu.memory_space<vmem>>) attributes {dimension_semantics = [#tpu.dimension_semantics<parallel>, #tpu.dimension_semantics<arbitrary>], iteration_bounds = array<i64: 1, 2>, scalar_prefetch = 0 : i64, scratch_operands = 1 : i64, tpu.core_type = #tpu.core_type<tc>, window_params = [{transform_indices = @transform_0, window_bounds = array<i64: 16, 128>}, {transform_indices = @transform_1, window_bounds = array<i64: 128, 256>}, {transform_indices = @transform_2, window_bounds = array<i64: 1, 256>}, {transform_indices = @transform_3, window_bounds = array<i64: 256, 128>}, {pipeline_mode = #tpu.pipeline_mode<synchronous>, transform_indices = @transform_4, window_bounds = array<i64: 1, 128>}, {pipeline_mode = #tpu.pipeline_mode<synchronous>, transform_indices = @transform_5, window_bounds = array<i64: 1, 128>}, {pipeline_mode = #tpu.pipeline_mode<synchronous>, transform_indices = @transform_6, window_bounds = array<i64: 1, 128>}, {transform_indices = @transform_7, window_bounds = array<i64: 16, 128>}]} {
    %c0_i32 = arith.constant 0 : i32
    %0 = arith.cmpi eq, %arg1, %c0_i32 : i32
    %1 = arith.extui %0 : i1 to i32
    %c0_i32_0 = arith.constant 0 : i32
    %2 = arith.cmpi ne, %1, %c0_i32_0 : i32
    scf.if %2 {
      %cst_15 = arith.constant 0.000000e+00 : f32
      %21 = vector.broadcast %cst_15 : f32 to vector<16x128xf32>
      %c0_16 = arith.constant 0 : index
      %c0_17 = arith.constant 0 : index
      %22 = vector.load %arg10[%c0_16, %c0_17] : memref<16x128xf32, #tpu.memory_space<vmem>>, vector<16x128xf32>
      tpu.vector_store %arg10[%c0_16, %c0_17], %21 {strides = array<i32>} : memref<16x128xf32, #tpu.memory_space<vmem>>, vector<16x128xf32>,
    } else {
    }
    %c0 = arith.constant 0 : index
    %c0_1 = arith.constant 0 : index
    %3 = vector.load %arg2[%c0, %c0_1] : memref<16x128xf32, #tpu.memory_space<vmem>>, vector<16x128xf32>
    %4 = arith.truncf %3 : vector<16x128xf32> to vector<16x128xbf16>
    %c0_2 = arith.constant 0 : index
    %c0_3 = arith.constant 0 : index
    %5 = vector.load %arg3[%c0_2, %c0_3] : memref<128x256xbf16, #tpu.memory_space<vmem>>, vector<128x256xbf16>
    %cst = arith.constant dense<0.000000e+00> : vector<16x256xf32>
    %6 = tpu.matmul %4, %5, %cst {dimension_numbers = #tpu.dot_dimension_numbers<[1], [0], [0], [1], [0, 0, 1, 1], [], []>} : vector<16x128xbf16>, vector<128x256xbf16>, vector<16x256xf32> -> vector<16x256xf32>
    %c0_4 = arith.constant 0 : index
    %c0_5 = arith.constant 0 : index
    %7 = vector.load %arg4[%c0_4, %c0_5] : memref<1x256xf32, #tpu.memory_space<vmem>>, vector<1x256xf32>
    %8 = vector.broadcast %7 : vector<1x256xf32> to vector<16x256xf32>
    %9 = arith.addf %6, %8 : vector<16x256xf32>
    %cst_6 = arith.constant 0.000000e+00 : f32
    %10 = vector.broadcast %cst_6 : f32 to vector<16x256xf32>
    %11 = arith.maximumf %9, %10 : vector<16x256xf32>
    %c0_7 = arith.constant 0 : index
    %c0_8 = arith.constant 0 : index
    %12 = vector.load %arg10[%c0_7, %c0_8] : memref<16x128xf32, #tpu.memory_space<vmem>>, vector<16x128xf32>
    %13 = arith.truncf %11 : vector<16x256xf32> to vector<16x256xbf16>
    %c0_9 = arith.constant 0 : index
    %c0_10 = arith.constant 0 : index
    %14 = vector.load %arg5[%c0_9, %c0_10] : memref<256x128xbf16, #tpu.memory_space<vmem>>, vector<256x128xbf16>
    %cst_11 = arith.constant dense<0.000000e+00> : vector<16x128xf32>
    %15 = tpu.matmul %13, %14, %cst_11 {dimension_numbers = #tpu.dot_dimension_numbers<[1], [0], [0], [1], [0, 0, 1, 1], [], []>} : vector<16x256xbf16>, vector<256x128xbf16>, vector<16x128xf32> -> vector<16x128xf32>
    %16 = arith.addf %12, %15 : vector<16x128xf32>
    %c0_12 = arith.constant 0 : index
    %c0_13 = arith.constant 0 : index
    %17 = vector.load %arg10[%c0_12, %c0_13] : memref<16x128xf32, #tpu.memory_space<vmem>>, vector<16x128xf32>
    tpu.vector_store %arg10[%c0_12, %c0_13], %16 {strides = array<i32>} : memref<16x128xf32, #tpu.memory_space<vmem>>, vector<16x128xf32>,
    %c1_i32 = arith.constant 1 : i32
    %18 = arith.cmpi eq, %arg1, %c1_i32 : i32
    %19 = arith.extui %18 : i1 to i32
    %c0_i32_14 = arith.constant 0 : i32
    %20 = arith.cmpi ne, %19, %c0_i32_14 : i32
    scf.if %20 {
      %c0_15 = arith.constant 0 : index
      %c0_16 = arith.constant 0 : index
      %21 = vector.load %arg2[%c0_15, %c0_16] : memref<16x128xf32, #tpu.memory_space<vmem>>, vector<16x128xf32>
      %c0_17 = arith.constant 0 : index
      %c0_18 = arith.constant 0 : index
      %22 = vector.load %arg10[%c0_17, %c0_18] : memref<16x128xf32, #tpu.memory_space<vmem>>, vector<16x128xf32>
      %c0_19 = arith.constant 0 : index
      %c0_20 = arith.constant 0 : index
      %23 = vector.load %arg6[%c0_19, %c0_20] : memref<1x128xf32, #tpu.memory_space<vmem>>, vector<1x128xf32>
      %24 = vector.broadcast %23 : vector<1x128xf32> to vector<16x128xf32>
      %25 = arith.addf %22, %24 : vector<16x128xf32>
      %26 = arith.addf %25, %21 : vector<16x128xf32>
      %cst_21 = arith.constant dense<0.000000e+00> : vector<16xf32>
      %27 = vector.multi_reduction <add>, %26, %cst_21 [1] : vector<16x128xf32> to vector<16xf32>
      %28 = vector.shape_cast %27 : vector<16xf32> to vector<16x1xf32>
      %cst_22 = arith.constant 1.280000e+02 : f32
      %29 = vector.broadcast %cst_22 : f32 to vector<16x1xf32>
      %30 = arith.divf %28, %29 : vector<16x1xf32>
      %31 = vector.broadcast %30 : vector<16x1xf32> to vector<16x128xf32>
      %32 = arith.subf %26, %31 : vector<16x128xf32>
      %33 = arith.mulf %32, %32 : vector<16x128xf32>
      %cst_23 = arith.constant dense<0.000000e+00> : vector<16xf32>
      %34 = vector.multi_reduction <add>, %33, %cst_23 [1] : vector<16x128xf32> to vector<16xf32>
      %35 = vector.shape_cast %34 : vector<16xf32> to vector<16x1xf32>
      %cst_24 = arith.constant 1.280000e+02 : f32
      %36 = vector.broadcast %cst_24 : f32 to vector<16x1xf32>
      %37 = arith.divf %35, %36 : vector<16x1xf32>
      %38 = vector.broadcast %30 : vector<16x1xf32> to vector<16x128xf32>
      %39 = arith.subf %26, %38 : vector<16x128xf32>
      %cst_25 = arith.constant 9.99999997E-7 : f32
      %40 = vector.broadcast %cst_25 : f32 to vector<16x1xf32>
      %41 = arith.addf %37, %40 : vector<16x1xf32>
      %42 = math.rsqrt %41 : vector<16x1xf32>
      %43 = vector.broadcast %42 : vector<16x1xf32> to vector<16x128xf32>
      %44 = arith.mulf %39, %43 : vector<16x128xf32>
      %c0_26 = arith.constant 0 : index
      %c0_27 = arith.constant 0 : index
      %45 = vector.load %arg7[%c0_26, %c0_27] : memref<1x128xf32, #tpu.memory_space<vmem>>, vector<1x128xf32>
      %46 = vector.broadcast %45 : vector<1x128xf32> to vector<16x128xf32>
      %47 = arith.mulf %44, %46 : vector<16x128xf32>
      %c0_28 = arith.constant 0 : index
      %c0_29 = arith.constant 0 : index
      %48 = vector.load %arg8[%c0_28, %c0_29] : memref<1x128xf32, #tpu.memory_space<vmem>>, vector<1x128xf32>
      %49 = vector.broadcast %48 : vector<1x128xf32> to vector<16x128xf32>
      %50 = arith.addf %47, %49 : vector<16x128xf32>
      %51 = arith.cmpf one, %50, %50 : vector<16x128xf32>
      %cst_30 = arith.constant 0.000000e+00 : f32
      %52 = vector.broadcast %cst_30 : f32 to vector<16x128xf32>
      %53 = arith.select %51, %52, %50 : vector<16x128xi1>, vector<16x128xf32>
      %c0_31 = arith.constant 0 : index
      %c0_32 = arith.constant 0 : index
      %54 = vector.load %arg9[%c0_31, %c0_32] : memref<16x128xf32, #tpu.memory_space<vmem>>, vector<16x128xf32>
      tpu.vector_store %arg9[%c0_31, %c0_32], %53 {strides = array<i32>} : memref<16x128xf32, #tpu.memory_space<vmem>>, vector<16x128xf32>,
    } else {
    }
    return
  }
  func.func @transform_0(%arg0: i32, %arg1: i32) -> (i32, i32) {
    %c0_i32 = arith.constant 0 : i32
    %c0_i32_0 = arith.constant 0 : i32
    return %arg0, %c0_i32 : i32, i32
  }
  func.func @transform_1(%arg0: i32, %arg1: i32) -> (i32, i32) {
    %c0_i32 = arith.constant 0 : i32
    %c0_i32_0 = arith.constant 0 : i32
    return %c0_i32, %arg1 : i32, i32
  }
  func.func @transform_2(%arg0: i32, %arg1: i32) -> (i32, i32) {
    %c0_i32 = arith.constant 0 : i32
    %c0_i32_0 = arith.constant 0 : i32
    return %c0_i32, %arg1 : i32, i32
  }
  func.func @transform_3(%arg0: i32, %arg1: i32) -> (i32, i32) {
    %c0_i32 = arith.constant 0 : i32
    %c0_i32_0 = arith.constant 0 : i32
    return %arg1, %c0_i32 : i32, i32
  }
  func.func @transform_4(%arg0: i32, %arg1: i32) -> (i32, i32) {
    %c0_i32 = arith.constant 0 : i32
    %c0_i32_0 = arith.constant 0 : i32
    %c0_i32_1 = arith.constant 0 : i32
    return %c0_i32, %c0_i32_0 : i32, i32
  }
  func.func @transform_5(%arg0: i32, %arg1: i32) -> (i32, i32) {
    %c0_i32 = arith.constant 0 : i32
    %c0_i32_0 = arith.constant 0 : i32
    %c0_i32_1 = arith.constant 0 : i32
    return %c0_i32, %c0_i32_0 : i32, i32
  }
  func.func @transform_6(%arg0: i32, %arg1: i32) -> (i32, i32) {
    %c0_i32 = arith.constant 0 : i32
    %c0_i32_0 = arith.constant 0 : i32
    %c0_i32_1 = arith.constant 0 : i32
    return %c0_i32, %c0_i32_0 : i32, i32
  }
  func.func @transform_7(%arg0: i32, %arg1: i32) -> (i32, i32) {
    %c0_i32 = arith.constant 0 : i32
    %c0_i32_0 = arith.constant 0 : i32
    return %arg0, %c0_i32 : i32, i32
  }
}

</mosaic_0001>

<llo_original>
// kernel: tpu_custom_call.1
$region0: #{tpu_custom_call.1}
  #allocation0 [shape = 'u32[]', space=smem, size = 0x4, offset = 0x4, fixed_abs, tag = 'smem constant byte address 0x4 - core index']
  #allocation1 [shape = 'u32[144,128]{1,0:T(1,128)}', space=vmem, size = 0x12000, scoped, tag = 'internal scratch']
  #allocation2 [shape = 'f32[16,128]{1,0:T(8,128)}', space=vmem, size = 0x2000, scoped, tag = 'scratch operand']
  %s0 = inlined_call_operand.hbm [shape: f32[16,128], index: 0, kind: input, shape index: {}]
  %s1 = inlined_call_operand.hbm [shape: bf16[128,512], index: 1, kind: input, shape index: {}]
  %s2 = inlined_call_operand.hbm [shape: f32[1,512], index: 2, kind: input, shape index: {}]
  %s3 = inlined_call_operand.hbm [shape: bf16[512,128], index: 3, kind: input, shape index: {}]
  %s4 = inlined_call_operand.vmem [shape: f32[1,128], index: 4, kind: input, shape index: {}]
  %s5 = inlined_call_operand.vmem [shape: f32[1,128], index: 5, kind: input, shape index: {}]
  %s6 = inlined_call_operand.vmem [shape: f32[1,128], index: 6, kind: input, shape index: {}]
  %s7 = inlined_call_operand.hbm [shape: f32[16,128], index: 7, kind: output, shape index: {}]
  %s8 = sld [smem:[#allocation0]]
  $region85: #{tpu_custom_call.1} parent=0
    _
  %s10 = ssub.s32 1, %s8
  %s11 = scalar_select 0, %s10, %s8
  $region1: #{tpu_custom_call.1} parent=0
    #allocation3 [shape = 'u8[8192]{0}', space=vmem, size = 0x2000, scoped, tag = 'input window, operand 0, single buffered']
    #allocation4 [shape = 's32[2]{0}', space=sflag, size = 0x8, scoped, tag = 'scoped memory for tpu_custom_call.1']
    #allocation5 [shape = 's32[2]{0}', space=sflag, size = 0x8, scoped, tag = 'scoped memory for tpu_custom_call.1']
    #allocation6 [shape = 'u8[131072]{0}', space=vmem, size = 0x20000, scoped, tag = 'input window, operand 1']
    #allocation7 [shape = 's32[2]{0}', space=sflag, size = 0x8, scoped, tag = 'scoped memory for tpu_custom_call.1']
    #allocation8 [shape = 'u8[2048]{0}', space=vmem, size = 0x800, scoped, tag = 'input window, operand 2']
    #allocation9 [shape = 'u8[131072]{0}', space=vmem, size = 0x20000, scoped, tag = 'input window, operand 3']
    #allocation10 [shape = 's32[2]{0}', space=sflag, size = 0x8, scoped, tag = 'scoped memory for tpu_custom_call.1']
    #allocation11 [shape = 'u8[8192]{0}', space=vmem, size = 0x2000, scoped, tag = 'output window, operand 0, single buffered']
    %12 = vsyncpa [#allocation4], 0
    %13 = vsyncpa [#allocation7], 0
    %s14 = scalar_lea.sflag [#allocation7], 1
    %15 = vsyncpa %s14, 0
    %16 = vsyncpa [#allocation10], 0
    %s17 = scalar_lea.sflag [#allocation10], 1
    %18 = vsyncpa %s17, 0
    %19 = vsyncpa [#allocation5], 0
    loop: start=0, step=1, limit=4
    $region2: #{tpu_custom_call.1} parent=1 // loop_pre_header
      _
    $region3: #{tpu_custom_call.1} parent=1 // loop_header
      %s21 = sphi 0, %s25
      %p22 = scmp.ge.s32.totalorder %s21, 4
      %s28 = sphi 0, %s40
      %s29 = sphi 0, %s36
      %s30 = sphi 0, %s28
      %s31 = sphi 0, %s29
      %s32 = sphi 0, %s30
      %s33 = sphi 0, %s31
      %s43 = sphi 0, %s45
      %s46 = sphi 0, %s43
      %s47 = sphi 0, %s46
      %s63 = sphi 0, %s47
      %s69 = sphi 0, %s71
      %s72 = sphi 0, %s69
      %s73 = sphi 0, %s72
      %s89 = sphi 0, %s73
      %s95 = sphi 0, %s97
      %s98 = sphi 0, %s95
      %s99 = sphi 0, %s98
      %s115 = sphi 0, %s99
      %s121 = sphi 0, %s123
      %s124 = sphi 0, %s121
      %s125 = sphi 0, %s124
      %s141 = sphi 0, %s125
      %s145 = sphi 0, %s145
      %s147 = sphi 0, %s145
      %s148 = sphi 0, %s147
      %s162 = sphi 0, %s148
      %s166 = sphi 0, %s166
      %s168 = sphi 0, %s166
      %s169 = sphi 0, %s168
      %s183 = sphi 0, %s169
      %s187 = sphi 0, %s187
      %s189 = sphi 0, %s187
      %s190 = sphi 0, %s189
      %s204 = sphi 0, %s190
      %s210 = sphi 0, %s212
      %s213 = sphi 0, %s210
      %s214 = sphi 0, %s213
      %s230 = sphi 0, %s214
    $region4: #{tpu_custom_call.1} parent=1 // loop_header_branch
      %24 = sbr.rel (%p22) target = $region8
    $region5: #{tpu_custom_call.1} parent=1 // loop_body
      %s26 = ssub.s32 %s21, 1
      %s27 = ssub.s32 %s21, 2
      %s34 = sadd.s32 1, %s29
      %p35 = scmp.ge.s32.totalorder %s34, 2
      %s36 = scalar_select %p35, 0, %s34
      %s37 = sadd.s32 1, %s28
      %s38 = scalar_select %p35, %s37, %s28
      %p39 = scmp.ge.s32.totalorder %s38, 1
      %s40 = scalar_select %p39, 0, %s38
      %s41 = ssub.s32 %s28, %s40
      %p42 = scmp.eq.s32.totalorder %s41, 0
      %s44 = sadd.s32 %s43, 1
      %s45 = scalar_select %p42, %s43, %s44
      %p48 = pneg %p42
      %p49 = scmp.eq.s32.totalorder %s21, 1
      %p50 = por %p48, %p49
      %p51 = scmp.ne.s32.totalorder %s43, %s46
      %p52 = scmp.eq.s32.totalorder %s21, 0
      %p53 = por %p51, %p52
      %p54 = scmp.ne.s32.totalorder %s43, %s46
      %p55 = scmp.eq.s32.totalorder %s26, 1
      %p56 = por %p54, %p55
      %p57 = scmp.ne.s32.totalorder %s46, %s47
      %p58 = scmp.eq.s32.totalorder %s26, 0
      %p59 = por %p57, %p58
      %p60 = scmp.ne.s32.totalorder %s46, %s47
      %p61 = scmp.eq.s32.totalorder %s27, 1
      %p62 = por %p60, %p61
      %p64 = scmp.ne.s32.totalorder %s47, %s63
      %p65 = scmp.eq.s32.totalorder %s27, 0
      %p66 = por %p64, %p65
      %s67 = ssub.s32 %s29, %s36
      %p68 = scmp.eq.s32.totalorder %s67, 0
      %s70 = sadd.s32 %s69, 1
      %s71 = scalar_select %p68, %s69, %s70
      %p74 = pneg %p68
      %p75 = scmp.eq.s32.totalorder %s21, 1
      %p76 = por %p74, %p75
      %p77 = scmp.ne.s32.totalorder %s69, %s72
      %p78 = scmp.eq.s32.totalorder %s21, 0
      %p79 = por %p77, %p78
      %p80 = scmp.ne.s32.totalorder %s69, %s72
      %p81 = scmp.eq.s32.totalorder %s26, 1
      %p82 = por %p80, %p81
      %p83 = scmp.ne.s32.totalorder %s72, %s73
      %p84 = scmp.eq.s32.totalorder %s26, 0
      %p85 = por %p83, %p84
      %p86 = scmp.ne.s32.totalorder %s72, %s73
      %p87 = scmp.eq.s32.totalorder %s27, 1
      %p88 = por %p86, %p87
      %p90 = scmp.ne.s32.totalorder %s73, %s89
      %p91 = scmp.eq.s32.totalorder %s27, 0
      %p92 = por %p90, %p91
      %s93 = ssub.s32 %s29, %s36
      %p94 = scmp.eq.s32.totalorder %s93, 0
      %s96 = sadd.s32 %s95, 1
      %s97 = scalar_select %p94, %s95, %s96
      %p100 = pneg %p94
      %p101 = scmp.eq.s32.totalorder %s21, 1
      %p102 = por %p100, %p101
      %p103 = scmp.ne.s32.totalorder %s95, %s98
      %p104 = scmp.eq.s32.totalorder %s21, 0
      %p105 = por %p103, %p104
      %p106 = scmp.ne.s32.totalorder %s95, %s98
      %p107 = scmp.eq.s32.totalorder %s26, 1
      %p108 = por %p106, %p107
      %p109 = scmp.ne.s32.totalorder %s98, %s99
      %p110 = scmp.eq.s32.totalorder %s26, 0
      %p111 = por %p109, %p110
      %p112 = scmp.ne.s32.totalorder %s98, %s99
      %p113 = scmp.eq.s32.totalorder %s27, 1
      %p114 = por %p112, %p113
      %p116 = scmp.ne.s32.totalorder %s99, %s115
      %p117 = scmp.eq.s32.totalorder %s27, 0
      %p118 = por %p116, %p117
      %s119 = ssub.s32 %s29, %s36
      %p120 = scmp.eq.s32.totalorder %s119, 0
      %s122 = sadd.s32 %s121, 1
      %s123 = scalar_select %p120, %s121, %s122
      %p126 = pneg %p120
      %p127 = scmp.eq.s32.totalorder %s21, 1
      %p128 = por %p126, %p127
      %p129 = scmp.ne.s32.totalorder %s121, %s124
      %p130 = scmp.eq.s32.totalorder %s21, 0
      %p131 = por %p129, %p130
      %p132 = scmp.ne.s32.totalorder %s121, %s124
      %p133 = scmp.eq.s32.totalorder %s26, 1
      %p134 = por %p132, %p133
      %p135 = scmp.ne.s32.totalorder %s124, %s125
      %p136 = scmp.eq.s32.totalorder %s26, 0
      %p137 = por %p135, %p136
      %p138 = scmp.ne.s32.totalorder %s124, %s125
      %p139 = scmp.eq.s32.totalorder %s27, 1
      %p140 = por %p138, %p139
      %p142 = scmp.ne.s32.totalorder %s125, %s141
      %p143 = scmp.eq.s32.totalorder %s27, 0
      %p144 = por %p142, %p143
      %s146 = sadd.s32 %s145, 1
      %p149 = scmp.eq.s32.totalorder %s21, 1
      %p150 = scmp.ne.s32.totalorder %s145, %s147
      %p151 = scmp.eq.s32.totalorder %s21, 0
      %p152 = por %p150, %p151
      %p153 = scmp.ne.s32.totalorder %s145, %s147
      %p154 = scmp.eq.s32.totalorder %s26, 1
      %p155 = por %p153, %p154
      %p156 = scmp.ne.s32.totalorder %s147, %s148
      %p157 = scmp.eq.s32.totalorder %s26, 0
      %p158 = por %p156, %p157
      %p159 = scmp.ne.s32.totalorder %s147, %s148
      %p160 = scmp.eq.s32.totalorder %s27, 1
      %p161 = por %p159, %p160
      %p163 = scmp.ne.s32.totalorder %s148, %s162
      %p164 = scmp.eq.s32.totalorder %s27, 0
      %p165 = por %p163, %p164
      %s167 = sadd.s32 %s166, 1
      %p170 = scmp.eq.s32.totalorder %s21, 1
      %p171 = scmp.ne.s32.totalorder %s166, %s168
      %p172 = scmp.eq.s32.totalorder %s21, 0
      %p173 = por %p171, %p172
      %p174 = scmp.ne.s32.totalorder %s166, %s168
      %p175 = scmp.eq.s32.totalorder %s26, 1
      %p176 = por %p174, %p175
      %p177 = scmp.ne.s32.totalorder %s168, %s169
      %p178 = scmp.eq.s32.totalorder %s26, 0
      %p179 = por %p177, %p178
      %p180 = scmp.ne.s32.totalorder %s168, %s169
      %p181 = scmp.eq.s32.totalorder %s27, 1
      %p182 = por %p180, %p181
      %p184 = scmp.ne.s32.totalorder %s169, %s183
      %p185 = scmp.eq.s32.totalorder %s27, 0
      %p186 = por %p184, %p185
      %s188 = sadd.s32 %s187, 1
      %p191 = scmp.eq.s32.totalorder %s21, 1
      %p192 = scmp.ne.s32.totalorder %s187, %s189
      %p193 = scmp.eq.s32.totalorder %s21, 0
      %p194 = por %p192, %p193
      %p195 = scmp.ne.s32.totalorder %s187, %s189
      %p196 = scmp.eq.s32.totalorder %s26, 1
      %p197 = por %p195, %p196
      %p198 = scmp.ne.s32.totalorder %s189, %s190
      %p199 = scmp.eq.s32.totalorder %s26, 0
      %p200 = por %p198, %p199
      %p201 = scmp.ne.s32.totalorder %s189, %s190
      %p202 = scmp.eq.s32.totalorder %s27, 1
      %p203 = por %p201, %p202
      %p205 = scmp.ne.s32.totalorder %s190, %s204
      %p206 = scmp.eq.s32.totalorder %s27, 0
      %p207 = por %p205, %p206
      %s208 = ssub.s32 %s28, %s40
      %p209 = scmp.eq.s32.totalorder %s208, 0
      %s211 = sadd.s32 %s210, 1
      %s212 = scalar_select %p209, %s210, %s211
      %p215 = pneg %p209
      %p216 = scmp.eq.s32.totalorder %s21, 1
      %p217 = por %p215, %p216
      %p218 = scmp.ne.s32.totalorder %s210, %s213
      %p219 = scmp.eq.s32.totalorder %s21, 0
      %p220 = por %p218, %p219
      %p221 = scmp.ne.s32.totalorder %s210, %s213
      %p222 = scmp.eq.s32.totalorder %s26, 1
      %p223 = por %p221, %p222
      %p224 = scmp.ne.s32.totalorder %s213, %s214
      %p225 = scmp.eq.s32.totalorder %s26, 0
      %p226 = por %p224, %p225
      %p227 = scmp.ne.s32.totalorder %s213, %s214
      %p228 = scmp.eq.s32.totalorder %s27, 1
      %p229 = por %p227, %p228
      %p231 = scmp.ne.s32.totalorder %s214, %s230
      %p232 = scmp.eq.s32.totalorder %s27, 0
      %p233 = por %p231, %p232
      %p234 = scmp.le.s32.totalorder 1, %s21
      %p235 = scmp.lt.s32.totalorder %s21, 3
      %p236 = pnand %p234, %p235
      %p237 = pneg %p236
      // Predicated region
      $region9: #{tpu_custom_call.1} parent=5 // pred_check
        _
      $region10: #{tpu_custom_call.1} parent=5 // pred_check_branch
        %239 = sbr.rel (%p236) target = $region12
      $region11: #{tpu_custom_call.1} parent=5 // pred_region
        %s240 = ssub.s32 %s21, 1
        // Predicated region
        $region13: #{tpu_custom_call.1} parent=11 // pred_check
          %p241 = pneg %p59
        $region14: #{tpu_custom_call.1} parent=11 // pred_check_branch
          %243 = sbr.rel (%p241) target = $region16
        $region15: #{tpu_custom_call.1} parent=11 // pred_region
          %s244 = smul.u32 2, %s30
          %s246 = ssub.s32 256, 256
          %247 = vsyncadd [#allocation4], %s246
          %s248 = smul.addr %s244, 128
          %s249 = scalar_lea.hbm %s0, %s248
          %s250 = sshll.u32 [#allocation3], 4
          %s251 = int_to_ptr.vmem [resolvable:$true] %s250
          %256 = dma.hbm_to_vmem [thread:$0]  %s249, 256, %s251, [#allocation4], 128, 128, 8
        $region16: #{tpu_custom_call.1} parent=11 // pred_fallthru
          _
        // Predicated region
        $region17: #{tpu_custom_call.1} parent=11 // pred_check
          %p257 = pneg %p158
        $region18: #{tpu_custom_call.1} parent=11 // pred_check_branch
          %259 = sbr.rel (%p257) target = $region20
        $region19: #{tpu_custom_call.1} parent=11 // pred_region
          _
        $region20: #{tpu_custom_call.1} parent=11 // pred_fallthru
          _
        // Predicated region
        $region21: #{tpu_custom_call.1} parent=11 // pred_check
          %p260 = pneg %p179
        $region22: #{tpu_custom_call.1} parent=11 // pred_check_branch
          %262 = sbr.rel (%p260) target = $region24
        $region23: #{tpu_custom_call.1} parent=11 // pred_region
          _
        $region24: #{tpu_custom_call.1} parent=11 // pred_fallthru
          _
        // Predicated region
        $region25: #{tpu_custom_call.1} parent=11 // pred_check
          %p263 = pneg %p200
        $region26: #{tpu_custom_call.1} parent=11 // pred_check_branch
          %265 = sbr.rel (%p263) target = $region28
        $region27: #{tpu_custom_call.1} parent=11 // pred_region
          _
        $region28: #{tpu_custom_call.1} parent=11 // pred_fallthru
          _
      $region12: #{tpu_custom_call.1} parent=5 // pred_fallthru
        _
      %p266 = scmp.lt.s32.totalorder %s21, 2
      // Predicated region
      $region29: #{tpu_custom_call.1} parent=5 // pred_check
        %p267 = pneg %p266
      $region30: #{tpu_custom_call.1} parent=5 // pred_check_branch
        %269 = sbr.rel (%p267) target = $region32
      $region31: #{tpu_custom_call.1} parent=5 // pred_region
        // Predicated region
        $region33: #{tpu_custom_call.1} parent=31 // pred_check
          %p270 = pneg %p79
        $region34: #{tpu_custom_call.1} parent=31 // pred_check_branch
          %272 = sbr.rel (%p270) target = $region36
        $region35: #{tpu_custom_call.1} parent=31 // pred_region
          %s273 = sand.u32 %s21, 1
          %s274 = scalar_lea.sflag [#allocation7], %s273
          %s275 = sand.u32 %s69, 1
          %s276 = smul.addr %s275, 128
          %s277 = scalar_lea.vmem [#allocation6], %s276
          %s278 = smul.u32 2, %s29
          %s280 = ssub.s32 2048, 2048
          %281 = vsyncadd %s274, %s280
          %s282 = smul.addr %s278, 64
          %s283 = scalar_lea.hbm %s1, %s282
          %s284 = sshll.u32 %s277, 4
          %s285 = int_to_ptr.vmem [resolvable:$true] %s284
          %290 = dma.hbm_to_vmem [thread:$0]  %s283, 2048, %s285, %s274, 256, 128, 8
        $region36: #{tpu_custom_call.1} parent=31 // pred_fallthru
          _
        // Predicated region
        $region37: #{tpu_custom_call.1} parent=31 // pred_check
          %p291 = pneg %p105
        $region38: #{tpu_custom_call.1} parent=31 // pred_check_branch
          %293 = sbr.rel (%p291) target = $region40
        $region39: #{tpu_custom_call.1} parent=31 // pred_region
          %s294 = sand.u32 %s21, 1
          %s295 = scalar_lea.sflag [#allocation7], %s294
          %s296 = sand.u32 %s95, 1
          %s297 = smul.addr %s296, 2
          %s298 = scalar_lea.vmem [#allocation8], %s297
          %s299 = smul.u32 2, %s29
          %s301 = ssub.s32 32, 32
          %302 = vsyncadd %s295, %s301
          %s303 = smul.addr %s299, 16
          %s304 = scalar_lea.hbm %s2, %s303
          %s306 = sshll.u32 %s298, 4
          %s307 = int_to_ptr.vmem [resolvable:$true] %s306
          %309 = dma.hbm_to_vmem [thread:$0]  %s304, 32, %s307, %s295
        $region40: #{tpu_custom_call.1} parent=31 // pred_fallthru
          _
        // Predicated region
        $region41: #{tpu_custom_call.1} parent=31 // pred_check
          %p310 = pneg %p131
        $region42: #{tpu_custom_call.1} parent=31 // pred_check_branch
          %312 = sbr.rel (%p310) target = $region44
        $region43: #{tpu_custom_call.1} parent=31 // pred_region
          %s313 = sand.u32 %s121, 1
          %s314 = scalar_lea.sflag [#allocation10], %s313
          %s315 = sand.u32 %s121, 1
          %s316 = smul.addr %s315, 128
          %s317 = scalar_lea.vmem [#allocation9], %s316
          %s318 = smul.u32 32, %s29
          %s320 = ssub.s32 2048, 2048
          %321 = vsyncadd %s314, %s320
          %s322 = smul.addr %s318, 64
          %s323 = scalar_lea.hbm %s3, %s322
          %s324 = sshll.u32 %s317, 4
          %s325 = int_to_ptr.vmem [resolvable:$true] %s324
          %330 = dma.hbm_to_vmem [thread:$0]  %s323, 2048, %s325, %s314, 64, 64, 4
        $region44: #{tpu_custom_call.1} parent=31 // pred_fallthru
          _
      $region32: #{tpu_custom_call.1} parent=5 // pred_fallthru
        _
      %p331 = scmp.le.s32.totalorder 1, %s21
      %p332 = scmp.lt.s32.totalorder %s21, 3
      %p333 = pnand %p331, %p332
      %p334 = pneg %p333
      // Predicated region
      $region45: #{tpu_custom_call.1} parent=5 // pred_check
        _
      $region46: #{tpu_custom_call.1} parent=5 // pred_check_branch
        %336 = sbr.rel (%p333) target = $region48
      $region47: #{tpu_custom_call.1} parent=5 // pred_region
        %s337 = ssub.s32 %s21, 1
        // Predicated region
        $region49: #{tpu_custom_call.1} parent=47 // pred_check
          %p338 = pneg %p59
        $region50: #{tpu_custom_call.1} parent=47 // pred_check_branch
          %340 = sbr.rel (%p338) target = $region52
        $region51: #{tpu_custom_call.1} parent=47 // pred_region
          %341 = dma.done [#allocation4], 256
        $region52: #{tpu_custom_call.1} parent=47 // pred_fallthru
          _
        %s342 = sand.u32 %s26, 1
        %s343 = scalar_lea.sflag [#allocation7], %s342
        %s344 = sand.u32 %s72, 1
        %s345 = smul.addr %s344, 128
        %s346 = scalar_lea.vmem [#allocation6], %s345
        // Predicated region
        $region53: #{tpu_custom_call.1} parent=47 // pred_check
          %p347 = pneg %p85
        $region54: #{tpu_custom_call.1} parent=47 // pred_check_branch
          %349 = sbr.rel (%p347) target = $region56
        $region55: #{tpu_custom_call.1} parent=47 // pred_region
          %350 = dma.done %s343, 2048
        $region56: #{tpu_custom_call.1} parent=47 // pred_fallthru
          _
        %s351 = sand.u32 %s26, 1
        %s352 = scalar_lea.sflag [#allocation7], %s351
        %s353 = sand.u32 %s98, 1
        %s354 = smul.addr %s353, 2
        %s355 = scalar_lea.vmem [#allocation8], %s354
        // Predicated region
        $region57: #{tpu_custom_call.1} parent=47 // pred_check
          %p356 = pneg %p111
        $region58: #{tpu_custom_call.1} parent=47 // pred_check_branch
          %358 = sbr.rel (%p356) target = $region60
        $region59: #{tpu_custom_call.1} parent=47 // pred_region
          %359 = dma.done %s352, 32
        $region60: #{tpu_custom_call.1} parent=47 // pred_fallthru
          _
        %s360 = sand.u32 %s124, 1
        %s361 = scalar_lea.sflag [#allocation10], %s360
        %s362 = sand.u32 %s124, 1
        %s363 = smul.addr %s362, 128
        %s364 = scalar_lea.vmem [#allocation9], %s363
        // Predicated region
        $region61: #{tpu_custom_call.1} parent=47 // pred_check
          %p365 = pneg %p137
        $region62: #{tpu_custom_call.1} parent=47 // pred_check_branch
          %367 = sbr.rel (%p365) target = $region64
        $region63: #{tpu_custom_call.1} parent=47 // pred_region
          %368 = dma.done %s361, 2048
        $region64: #{tpu_custom_call.1} parent=47 // pred_fallthru
          _
        %p369 = pneg %p59
        %p370 = pneg %p56
        %s371 = sand.u32 %s26, 1
        %s372 = scalar_lea.sflag [#allocation7], %s371
        %s373 = sand.u32 %s72, 1
        %s374 = smul.addr %s373, 128
        %s375 = scalar_lea.vmem [#allocation6], %s374
        %p376 = pneg %p85
        %p377 = pneg %p82
        %s378 = sand.u32 %s26, 1
        %s379 = scalar_lea.sflag [#allocation7], %s378
        %s380 = sand.u32 %s98, 1
        %s381 = smul.addr %s380, 2
        %s382 = scalar_lea.vmem [#allocation8], %s381
        %p383 = pneg %p111
        %p384 = pneg %p108
        %s385 = sand.u32 %s124, 1
        %s386 = scalar_lea.sflag [#allocation10], %s385
        %s387 = sand.u32 %s124, 1
        %s388 = smul.addr %s387, 128
        %s389 = scalar_lea.vmem [#allocation9], %s388
        %p390 = pneg %p137
        %p391 = pneg %p134
        %p392 = pneg %p158
        %p393 = pneg %p155
        %p394 = pneg %p179
        %p395 = pneg %p176
        %p396 = pneg %p200
        %p397 = pneg %p197
        %p398 = pneg %p226
        %p399 = pneg %p223
        %s400 = smul.u32 2, %s30
        %s401 = smul.u32 2, %s31
        %s402 = smul.u32 2, %s31
        %s403 = smul.u32 32, %s31
        %s404 = smul.u32 2, %s30
        %p406 = scmp.eq.s32.totalorder %s31, 0
        // Predicated region
        $region65: #{tpu_custom_call.1} parent=47 // pred_check
          %p407 = pneg %p406
        $region66: #{tpu_custom_call.1} parent=47 // pred_check_branch
          %409 = sbr.rel (%p407) target = $region68
        $region67: #{tpu_custom_call.1} parent=47 // pred_region
          %410 = vst [vmem:[#allocation2] sm:$0xff] 0.0
          %411 = vst [vmem:[#allocation2 + $0x8] sm:$0xff] 0.0
        $region68: #{tpu_custom_call.1} parent=47 // pred_fallthru
          _
        %v412 = vld [vmem:[#allocation3] sm:$0xff]
        %v413 = vld [vmem:[#allocation3 + $0x8] sm:$0xff]
        %v414 = vpack.c.bf16 %v413, %v412
        %v415 = vld [vmem:[%s346] sm:$0xff]
        %v416 = vld [vmem:[%s346 + $0x8] sm:$0xff]
        %v417 = vld [vmem:[%s346 + $0x10] sm:$0xff]
        %v418 = vld [vmem:[%s346 + $0x18] sm:$0xff]
        %v419 = vld [vmem:[%s346 + $0x20] sm:$0xff]
        %v420 = vld [vmem:[%s346 + $0x28] sm:$0xff]
        %v421 = vld [vmem:[%s346 + $0x30] sm:$0xff]
        %v422 = vld [vmem:[%s346 + $0x38] sm:$0xff]
        %v423 = vld [vmem:[%s346 + $0x40] sm:$0xff]
        %v424 = vld [vmem:[%s346 + $0x48] sm:$0xff]
        %v425 = vld [vmem:[%s346 + $0x50] sm:$0xff]
        %v426 = vld [vmem:[%s346 + $0x58] sm:$0xff]
        %v427 = vld [vmem:[%s346 + $0x60] sm:$0xff]
        %v428 = vld [vmem:[%s346 + $0x68] sm:$0xff]
        %v429 = vld [vmem:[%s346 + $0x70] sm:$0xff]
        %v430 = vld [vmem:[%s346 + $0x78] sm:$0xff]
        %v431 = vld [vmem:[%s355] sm:$0x3]
        %v433 = vlaneseq
        %v434 = vshrl.u32 %v433, 7
        %v435 = vsub.s32 0, %v434
        %v436 = vrot.slane %v431, %v435
        %v437 = vlaneseq
        %v438 = vshrl.u32 %v437, 7
        %v439 = vsub.s32 1, %v438
        %v440 = vrot.slane %v431, %v439
        %v459 = vunpack.c.l.b16 %v415
        %v460 = vunpack.c.h.b16 %v415
        %v461 = vunpack.c.l.b16 %v416
        %v462 = vunpack.c.h.b16 %v416
        %v463 = vunpack.c.l.b16 %v417
        %v464 = vunpack.c.h.b16 %v417
        %v465 = vunpack.c.l.b16 %v418
        %v466 = vunpack.c.h.b16 %v418
        %v467 = vunpack.c.l.b16 %v419
        %v468 = vunpack.c.h.b16 %v419
        %v469 = vunpack.c.l.b16 %v420
        %v470 = vunpack.c.h.b16 %v420
        %v471 = vunpack.c.l.b16 %v421
        %v472 = vunpack.c.h.b16 %v421
        %v473 = vunpack.c.l.b16 %v422
        %v474 = vunpack.c.h.b16 %v422
        %v475 = vunpack.c.l.b16 %v423
        %v476 = vunpack.c.h.b16 %v423
        %v477 = vunpack.c.l.b16 %v424
        %v478 = vunpack.c.h.b16 %v424
        %v479 = vunpack.c.l.b16 %v425
        %v480 = vunpack.c.h.b16 %v425
        %v481 = vunpack.c.l.b16 %v426
        %v482 = vunpack.c.h.b16 %v426
        %v483 = vunpack.c.l.b16 %v427
        %v484 = vunpack.c.h.b16 %v427
        %v485 = vunpack.c.l.b16 %v428
        %v486 = vunpack.c.h.b16 %v428
        %v487 = vunpack.c.l.b16 %v429
        %v488 = vunpack.c.h.b16 %v429
        %v489 = vunpack.c.l.b16 %v430
        %v490 = vunpack.c.h.b16 %v430
        %v491 = vpack.c.b16 %v461, %v459
        %v492 = vpack.c.b16 %v462, %v460
        %v493 = vpack.c.b16 %v465, %v463
        %v494 = vpack.c.b16 %v466, %v464
        %v495 = vpack.c.b16 %v469, %v467
        %v496 = vpack.c.b16 %v470, %v468
        %v497 = vpack.c.b16 %v473, %v471
        %v498 = vpack.c.b16 %v474, %v472
        %v499 = vpack.c.b16 %v477, %v475
        %v500 = vpack.c.b16 %v478, %v476
        %v501 = vpack.c.b16 %v481, %v479
        %v502 = vpack.c.b16 %v482, %v480
        %v503 = vpack.c.b16 %v485, %v483
        %v504 = vpack.c.b16 %v486, %v484
        %v505 = vpack.c.b16 %v489, %v487
        %v506 = vpack.c.b16 %v490, %v488
        %523 = vmatprep.subr.bf16.mxu0 %v506
        %524 = vmatpush1.bf16.msra.mxu0 %v505
        %525 = vmatprep.subr.bf16.mxu0 %v504
        %526 = vmatpush1.bf16.msra.mxu0 %v503
        %527 = vmatprep.subr.bf16.mxu0 %v502
        %528 = vmatpush1.bf16.msra.mxu0 %v501
        %529 = vmatprep.subr.bf16.mxu0 %v500
        %530 = vmatpush1.bf16.msra.mxu0 %v499
        %531 = vmatprep.subr.bf16.mxu0 %v498
        %532 = vmatpush1.bf16.msra.mxu0 %v497
        %533 = vmatprep.subr.bf16.mxu0 %v496
        %534 = vmatpush1.bf16.msra.mxu0 %v495
        %535 = vmatprep.subr.bf16.mxu0 %v494
        %536 = vmatpush1.bf16.msra.mxu0 %v493
        %537 = vmatprep.subr.bf16.mxu0 %v492
        %538 = vmatpush1.bf16.msra.mxu0 %v491
        %539 = vmatprep.subr.bf16.mxu0 0
        %540 = vmatpush2.bf16.msra.mxu0 0
        %541 = vmatprep.subr.bf16.mxu0 0
        %542 = vmatpush2.bf16.msra.mxu0 0
        %543 = vmatprep.subr.bf16.mxu0 0
        %544 = vmatpush2.bf16.msra.mxu0 0
        %545 = vmatprep.subr.bf16.mxu0 0
        %546 = vmatpush2.bf16.msra.mxu0 0
        %547 = vmatprep.subr.bf16.mxu0 0
        %548 = vmatpush2.bf16.msra.mxu0 0
        %549 = vmatprep.subr.bf16.mxu0 0
        %550 = vmatpush2.bf16.msra.mxu0 0
        %551 = vmatprep.subr.bf16.mxu0 0
        %552 = vmatpush2.bf16.msra.mxu0 0
        %553 = vmatprep.subr.bf16.mxu0 0
        %554 = vmatpush2.bf16.msra.mxu0 0
        %555 = vmatprep.mubr.bf16.mxu0 0
        %556 = vmatmul.mubr.bf16.gmra.mxu0 %v414
        %v557 = vpop.f32.mrf.mxu0
        %v558 = vadd.f32 %v436, %v557
        %v559 = vpop.f32.mrf.mxu0
        %v560 = vadd.f32 %v440, %v559
        %v561 = vpop.f32.mrf.mxu0
        %v562 = vadd.f32 %v436, %v561
        %v563 = vpop.f32.mrf.mxu0
        %v564 = vadd.f32 %v440, %v563
        %565 = vdwg.mxu0
        %v566 = vmax.f32 %v558, 0.0
        %v567 = vmax.f32 %v560, 0.0
        %v568 = vmax.f32 %v562, 0.0
        %v569 = vmax.f32 %v564, 0.0
        %v570 = vld [vmem:[#allocation2] sm:$0xff]
        %v571 = vld [vmem:[#allocation2 + $0x8] sm:$0xff]
        %v572 = vpack.c.bf16 %v568, %v566
        %v573 = vpack.c.bf16 %v569, %v567
        %v574 = vld [vmem:[%s364] sm:$0xf]
        %v575 = vld [vmem:[%s364 + $0x4] sm:$0xf]
        %v576 = vld [vmem:[%s364 + $0x8] sm:$0xf]
        %v577 = vld [vmem:[%s364 + $0xc] sm:$0xf]
        %v578 = vld [vmem:[%s364 + $0x10] sm:$0xf]
        %v579 = vld [vmem:[%s364 + $0x14] sm:$0xf]
        %v580 = vld [vmem:[%s364 + $0x18] sm:$0xf]
        %v581 = vld [vmem:[%s364 + $0x1c] sm:$0xf]
        %v582 = vld [vmem:[%s364 + $0x20] sm:$0xf]
        %v583 = vld [vmem:[%s364 + $0x24] sm:$0xf]
        %v584 = vld [vmem:[%s364 + $0x28] sm:$0xf]
        %v585 = vld [vmem:[%s364 + $0x2c] sm:$0xf]
        %v586 = vld [vmem:[%s364 + $0x30] sm:$0xf]
        %v587 = vld [vmem:[%s364 + $0x34] sm:$0xf]
        %v588 = vld [vmem:[%s364 + $0x38] sm:$0xf]
        %v589 = vld [vmem:[%s364 + $0x3c] sm:$0xf]
        %v590 = vld [vmem:[%s364 + $0x40] sm:$0xf]
        %v591 = vld [vmem:[%s364 + $0x44] sm:$0xf]
        %v592 = vld [vmem:[%s364 + $0x48] sm:$0xf]
        %v593 = vld [vmem:[%s364 + $0x4c] sm:$0xf]
        %v594 = vld [vmem:[%s364 + $0x50] sm:$0xf]
        %v595 = vld [vmem:[%s364 + $0x54] sm:$0xf]
        %v596 = vld [vmem:[%s364 + $0x58] sm:$0xf]
        %v597 = vld [vmem:[%s364 + $0x5c] sm:$0xf]
        %v598 = vld [vmem:[%s364 + $0x60] sm:$0xf]
        %v599 = vld [vmem:[%s364 + $0x64] sm:$0xf]
        %v600 = vld [vmem:[%s364 + $0x68] sm:$0xf]
        %v601 = vld [vmem:[%s364 + $0x6c] sm:$0xf]
        %v602 = vld [vmem:[%s364 + $0x70] sm:$0xf]
        %v603 = vld [vmem:[%s364 + $0x74] sm:$0xf]
        %v604 = vld [vmem:[%s364 + $0x78] sm:$0xf]
        %v605 = vld [vmem:[%s364 + $0x7c] sm:$0xf]
        %v638 = vunpack.c.l.b16 %v574
        %v639 = vunpack.c.l.b16 %v575
        %v640 = vunpack.c.l.b16 %v576
        %v641 = vunpack.c.l.b16 %v577
        %v642 = vunpack.c.l.b16 %v578
        %v643 = vunpack.c.l.b16 %v579
        %v644 = vunpack.c.l.b16 %v580
        %v645 = vunpack.c.l.b16 %v581
        %v646 = vunpack.c.l.b16 %v582
        %v647 = vunpack.c.l.b16 %v583
        %v648 = vunpack.c.l.b16 %v584
        %v649 = vunpack.c.l.b16 %v585
        %v650 = vunpack.c.l.b16 %v586
        %v651 = vunpack.c.l.b16 %v587
        %v652 = vunpack.c.l.b16 %v588
        %v653 = vunpack.c.l.b16 %v589
        %v654 = vunpack.c.l.b16 %v590
        %v655 = vunpack.c.l.b16 %v591
        %v656 = vunpack.c.l.b16 %v592
        %v657 = vunpack.c.l.b16 %v593
        %v658 = vunpack.c.l.b16 %v594
        %v659 = vunpack.c.l.b16 %v595
        %v660 = vunpack.c.l.b16 %v596
        %v661 = vunpack.c.l.b16 %v597
        %v662 = vunpack.c.l.b16 %v598
        %v663 = vunpack.c.l.b16 %v599
        %v664 = vunpack.c.l.b16 %v600
        %v665 = vunpack.c.l.b16 %v601
        %v666 = vunpack.c.l.b16 %v602
        %v667 = vunpack.c.l.b16 %v603
        %v668 = vunpack.c.l.b16 %v604
        %v669 = vunpack.c.l.b16 %v605
        %v670 = vpack.c.b16 %v639, %v638
        %v671 = vpack.c.b16 %v641, %v640
        %v672 = vpack.c.b16 %v643, %v642
        %v673 = vpack.c.b16 %v645, %v644
        %v674 = vpack.c.b16 %v647, %v646
        %v675 = vpack.c.b16 %v649, %v648
        %v676 = vpack.c.b16 %v651, %v650
        %v677 = vpack.c.b16 %v653, %v652
        %v678 = vpack.c.b16 %v655, %v654
        %v679 = vpack.c.b16 %v657, %v656
        %v680 = vpack.c.b16 %v659, %v658
        %v681 = vpack.c.b16 %v661, %v660
        %v682 = vpack.c.b16 %v663, %v662
        %v683 = vpack.c.b16 %v665, %v664
        %v684 = vpack.c.b16 %v667, %v666
        %v685 = vpack.c.b16 %v669, %v668
        %702 = vmatprep.subr.bf16.mxu0 0
        %703 = vmatpush1.bf16.msra.mxu0 %v677
        %704 = vmatprep.subr.bf16.mxu0 0
        %705 = vmatpush1.bf16.msra.mxu0 %v676
        %706 = vmatprep.subr.bf16.mxu0 0
        %707 = vmatpush1.bf16.msra.mxu0 %v675
        %708 = vmatprep.subr.bf16.mxu0 0
        %709 = vmatpush1.bf16.msra.mxu0 %v674
        %710 = vmatprep.subr.bf16.mxu0 0
        %711 = vmatpush1.bf16.msra.mxu0 %v673
        %712 = vmatprep.subr.bf16.mxu0 0
        %713 = vmatpush1.bf16.msra.mxu0 %v672
        %714 = vmatprep.subr.bf16.mxu0 0
        %715 = vmatpush1.bf16.msra.mxu0 %v671
        %716 = vmatprep.subr.bf16.mxu0 0
        %717 = vmatpush1.bf16.msra.mxu0 %v670
        %718 = vmatprep.subr.bf16.mxu0 0
        %719 = vmatpush2.bf16.msra.mxu0 %v685
        %720 = vmatprep.subr.bf16.mxu0 0
        %721 = vmatpush2.bf16.msra.mxu0 %v684
        %722 = vmatprep.subr.bf16.mxu0 0
        %723 = vmatpush2.bf16.msra.mxu0 %v683
        %724 = vmatprep.subr.bf16.mxu0 0
        %725 = vmatpush2.bf16.msra.mxu0 %v682
        %726 = vmatprep.subr.bf16.mxu0 0
        %727 = vmatpush2.bf16.msra.mxu0 %v681
        %728 = vmatprep.subr.bf16.mxu0 0
        %729 = vmatpush2.bf16.msra.mxu0 %v680
        %730 = vmatprep.subr.bf16.mxu0 0
        %731 = vmatpush2.bf16.msra.mxu0 %v679
        %732 = vmatprep.subr.bf16.mxu0 0
        %733 = vmatpush2.bf16.msra.mxu0 %v678
        %734 = vmatprep.mubr.bf16.mxu0 %v573
        %735 = vmatmul.mubr.bf16.gmra.mxu0 %v572
        %v736 = vpop.f32.mrf.mxu0
        %v737 = vadd.f32 0.0, %v736
        %v738 = vpop.f32.mrf.mxu0
        %v739 = vpop.f32.mrf.mxu0
        %v740 = vadd.f32 0.0, %v739
        %v741 = vpop.f32.mrf.mxu0
        %742 = vdwg.mxu0
        %v743 = vadd.f32 %v570, %v737
        %v744 = vadd.f32 %v571, %v740
        %745 = vst [vmem:[#allocation2] sm:$0xff] %v743
        %746 = vst [vmem:[#allocation2 + $0x8] sm:$0xff] %v744
        %p747 = scmp.eq.s32.totalorder %s31, 1
        // Predicated region
        $region69: #{tpu_custom_call.1} parent=47 // pred_check
          %p748 = pneg %p747
        $region70: #{tpu_custom_call.1} parent=47 // pred_check_branch
          %750 = sbr.rel (%p748) target = $region72
        $region71: #{tpu_custom_call.1} parent=47 // pred_region
          %v751 = vld [vmem:[#allocation3] sm:$0xff]
          %v752 = vld [vmem:[#allocation3 + $0x8] sm:$0xff]
          %v753 = vld [vmem:[#allocation2] sm:$0xff]
          %v754 = vld [vmem:[#allocation2 + $0x8] sm:$0xff]
          %v755 = vld [vmem:[%s4] sm:$0x1]
          %v757 = vlaneseq
          %v758 = vshrl.u32 %v757, 7
          %v759 = vsub.s32 0, %v758
          %v760 = vrot.slane %v755, %v759
          %v762 = vadd.f32 %v753, %v760
          %v763 = vadd.f32 %v754, %v760
          %v764 = vadd.f32 %v762, %v751
          %v765 = vadd.f32 %v763, %v752
          %766 = vadd.xlane.f32.xlu0 %v764
          %v767 = vpop.xlane.xlu0 %766
          %768 = vadd.xlane.f32.xlu0 %v765
          %v769 = vpop.xlane.xlu0 %768
          %v770 = vrcp.pop 128.0
          %v771 = vmul.f32 %v767, %v770
          %v772 = vmul.f32 %v769, %v770
          %v773 = vsub.f32 %v764, %v771
          %v774 = vsub.f32 %v765, %v772
          %v775 = vmul.f32 %v773, %v773
          %v776 = vmul.f32 %v774, %v774
          %777 = vadd.xlane.f32.xlu0 %v775
          %v778 = vpop.xlane.xlu0 %777
          %779 = vadd.xlane.f32.xlu0 %v776
          %v780 = vpop.xlane.xlu0 %779
          %v781 = vmul.f32 %v778, %v770
          %v782 = vmul.f32 %v780, %v770
          %v783 = vadd.f32 %v781, 1e-06
          %v784 = vadd.f32 %v782, 1e-06
          %v785 = vrsqrt.pop %v783
          %v786 = vrsqrt.pop %v784
          %v787 = vmul.f32 %v773, %v785
          %v788 = vmul.f32 %v774, %v786
          %v789 = vld [vmem:[%s5] sm:$0x1]
          %v791 = vlaneseq
          %v792 = vshrl.u32 %v791, 7
          %v793 = vsub.s32 0, %v792
          %v794 = vrot.slane %v789, %v793
          %v796 = vmul.f32 %v787, %v794
          %v797 = vmul.f32 %v788, %v794
          %v798 = vld [vmem:[%s6] sm:$0x1]
          %v800 = vlaneseq
          %v801 = vshrl.u32 %v800, 7
          %v802 = vsub.s32 0, %v801
          %v803 = vrot.slane %v798, %v802
          %v805 = vadd.f32 %v796, %v803
          %v806 = vadd.f32 %v797, %v803
          %vm807 = vcmp.ne.f32.partialorder %v805, %v805
          %vm808 = vcmp.ne.f32.partialorder %v806, %v806
          %v809 = vsel %vm807, 0.0, %v805
          %v810 = vsel %vm808, 0.0, %v806
          %811 = vst [vmem:[#allocation11] sm:$0xff] %v809
          %812 = vst [vmem:[#allocation11 + $0x8] sm:$0xff] %v810
        $region72: #{tpu_custom_call.1} parent=47 // pred_fallthru
          _
        // Predicated region
        $region73: #{tpu_custom_call.1} parent=47 // pred_check
          %p813 = pneg %p223
        $region74: #{tpu_custom_call.1} parent=47 // pred_check_branch
          %815 = sbr.rel (%p813) target = $region76
        $region75: #{tpu_custom_call.1} parent=47 // pred_region
          %s816 = smul.u32 2, %s30
          %s818 = ssub.s32 256, 256
          %819 = vsyncadd [#allocation5], %s818
          %s820 = smul.addr %s816, 128
          %s821 = scalar_lea.hbm %s7, %s820
          %s822 = sshll.u32 [#allocation11], 4
          %s823 = int_to_ptr.vmem [resolvable:$true] %s822
          %828 = dma.vmem_to_hbm [thread:$0]  %s823, 256, %s821, [#allocation5], 128, 128, 8
        $region76: #{tpu_custom_call.1} parent=47 // pred_fallthru
          _
        // Predicated region
        $region77: #{tpu_custom_call.1} parent=47 // pred_check
          %p829 = pneg %p223
        $region78: #{tpu_custom_call.1} parent=47 // pred_check_branch
          %831 = sbr.rel (%p829) target = $region80
        $region79: #{tpu_custom_call.1} parent=47 // pred_region
          %832 = dma.done [#allocation5], 256
        $region80: #{tpu_custom_call.1} parent=47 // pred_fallthru
          _
      $region48: #{tpu_custom_call.1} parent=5 // pred_fallthru
        _
      %p833 = scmp.le.s32.totalorder 2, %s21
      // Predicated region
      $region81: #{tpu_custom_call.1} parent=5 // pred_check
        %p834 = pneg %p833
      $region82: #{tpu_custom_call.1} parent=5 // pred_check_branch
        %836 = sbr.rel (%p834) target = $region84
      $region83: #{tpu_custom_call.1} parent=5 // pred_region
        %s837 = ssub.s32 %s21, 2
      $region84: #{tpu_custom_call.1} parent=5 // pred_fallthru
        _
    $region6: #{tpu_custom_call.1} parent=1 // loop_footer
      %s25 = sadd.s32 1, %s21
    $region7: #{tpu_custom_call.1} parent=1 // loop_footer_branch
      %20 = sbr.rel target = $region3
    $region8: #{tpu_custom_call.1} parent=1 // loop_exit
      _
    %838 = vsyncpa [#allocation4], 1
    %s839 = scalar_lea.sflag [#allocation4], 1
    %840 = vsyncpa %s839, 1
    %841 = vsyncpa [#allocation7], 1
    %s842 = scalar_lea.sflag [#allocation7], 1
    %843 = vsyncpa %s842, 1
    %844 = vsyncpa [#allocation10], 1
    %s845 = scalar_lea.sflag [#allocation10], 1
    %846 = vsyncpa %s845, 1
    %847 = vsyncpa [#allocation5], 1
    %s848 = scalar_lea.sflag [#allocation5], 1
    %849 = vsyncpa %s848, 1

</llo_original>
